<compile_context>
chip_gen: v7x
topology: tpu7x:2x2x1
jax: 0.10.0
libtpu: 0.0.40
codegen_flags: <defaults>
</compile_context>

<pallas_src>
import functools

import jax
import jax.numpy as jnp
from jax import lax
from jax.experimental import pallas as pl
from jax.experimental.pallas import tpu as pltpu


def _dca_kernel(beta_ref, logits_ref, targets_ref, out_ref, acc_ref,
                *, n_total: int, block_n: int):
    pid = pl.program_id(0)
    last = pl.num_programs(0) - 1

    @pl.when(pid == 0)
    def _init():
        acc_ref[0] = jnp.float32(0.0)   # sum of per-row cross-entropy
        acc_ref[1] = jnp.float32(0.0)   # sum of (conf - correct)

    logits = logits_ref[...].astype(jnp.float32)           # (BN, C)
    targets = targets_ref[...]                              # (BN, 1) int32
    bn, c = logits.shape

    needs_mask = (n_total % block_n) != 0                    # static Python bool
    if needs_mask:
        row_ids = pid * block_n + lax.broadcasted_iota(jnp.int32, (bn, 1), 0)
        valid_b = row_ids < n_total                          # (BN, 1)
        valid_f = valid_b.astype(jnp.float32)
        # Sanitize padded rows so exp/log stay finite (0*nan would poison sums).
        logits = jnp.where(valid_b, logits, jnp.float32(0.0))

    # --- Row-wise stable softmax pieces (one pass over the (BN, C) tile). ---
    row_max = jnp.max(logits, axis=1, keepdims=True)                    # (BN,1)
    denom = jnp.sum(jnp.exp(logits - row_max), axis=1, keepdims=True)   # (BN,1)
    # conf = max softmax prob = exp(row_max - row_max) / denom = 1 / denom.
    # Exact reciprocal (approx EUP rcp is ~1e-3 rel err; loss is a scalar, keep it tight).
    conf = pl.reciprocal(denom, approx=False)                           # (BN,1)

    col_idx = lax.broadcasted_iota(jnp.int32, (bn, c), 1)               # (BN,C)
    onehot = (col_idx == targets).astype(jnp.float32)
    tgt_logit = jnp.sum(logits * onehot, axis=1, keepdims=True)         # (BN,1)

    # pred = FIRST index attaining the row max (matches torch.max tie-breaking).
    masked_idx = jnp.where(logits == row_max, col_idx, jnp.int32(c))
    pred = jnp.min(masked_idx, axis=1, keepdims=True)                   # (BN,1)
    correct = (pred == targets).astype(jnp.float32)                     # (BN,1)

    # Cross-entropy per row: logsumexp - logit[target].
    ce = row_max + jnp.log(denom) - tgt_logit                           # (BN,1)

    if needs_mask:
        ce_sum = jnp.sum(ce * valid_f)
        cc_sum = jnp.sum((conf - correct) * valid_f)
    else:
        ce_sum = jnp.sum(ce)
        cc_sum = jnp.sum(conf - correct)

    acc_ref[0] += ce_sum
    acc_ref[1] += cc_sum

    @pl.when(pid == last)
    def _finalize():
        inv_n = jnp.float32(1.0 / n_total)
        out_ref[0, 0] = (acc_ref[0] * inv_n
                         + beta_ref[0] * jnp.abs(acc_ref[1] * inv_n))


def _pick_block_n(n: int, c: int, budget_bytes: int = 24 * 1024 * 1024) -> int:
    """Largest row tile (multiple of 8) keeping double-buffered inputs under a
    VMEM budget that is safe for v5e/v6e/v7x scoped-VMEM defaults."""
    if n <= 8:
        return n
    c_pad = max(c, 128)                       # lane padding of the logits tile
    per_row = 2 * (c_pad + 128) * 4           # 2 buffers x (logits row + targets row), f32 worst case
    max_rows = max(8, budget_bytes // per_row)
    block = min(1024, max_rows, n)            # big tiles amortize per-step overhead
    return max(8, (block // 8) * 8)


def dca_loss(logits: jax.Array, targets: jax.Array, beta: float = 1.0,
             block_n: int | None = None) -> jax.Array:
    """DCA loss. logits: [N, C] float (f32 or bf16), targets: [N] int."""
    n, c = logits.shape
    if block_n is None:
        block_n = _pick_block_n(n, c)

    targets2d = targets.astype(jnp.int32).reshape(n, 1)
    beta_arr = jnp.asarray([beta], dtype=jnp.float32)

    grid = (pl.cdiv(n, block_n),)

    out = pl.pallas_call(
        functools.partial(_dca_kernel, n_total=n, block_n=block_n),
        out_shape=jax.ShapeDtypeStruct((1, 1), jnp.float32),
        grid=grid,
        in_specs=[
            pl.BlockSpec(memory_space=pltpu.MemorySpace.SMEM),        # beta scalar
            pl.BlockSpec((block_n, c), lambda i: (i, 0)),             # logits tile
            pl.BlockSpec((block_n, 1), lambda i: (i, 0)),             # targets tile
        ],
        out_specs=pl.BlockSpec(memory_space=pltpu.MemorySpace.SMEM),
        scratch_shapes=[pltpu.SMEM((2,), jnp.float32)],
        compiler_params=pltpu.CompilerParams(
            dimension_semantics=("arbitrary",),   # accumulator across the grid axis
            vmem_limit_bytes=48 * 1024 * 1024,
        ),
    )(beta_arr, logits, targets2d)
    return out[0, 0]


def _dca_reference(logits, targets, beta=1.0):
    # Pure-JAX reference mirroring the PyTorch module.
    logits = logits.astype(jnp.float32)
    probs = jax.nn.softmax(logits, axis=1)
    conf = jnp.max(probs, axis=1)
    pred = jnp.argmax(probs, axis=1)
    calib = jnp.abs(conf.mean() - (pred == targets).astype(jnp.float32).mean())
    logz = jax.nn.logsumexp(logits, axis=1)
    ce = (logz - jnp.take_along_axis(logits, targets[:, None], axis=1)[:, 0]).mean()
    return ce + beta * calib


if __name__ == "__main__":
    key = jax.random.PRNGKey(0)
    k1, k2, k3, k4, k5, k6 = jax.random.split(key, 6)

    # Case 1: small, single tile (batch=8, classes=16).
    N1, C1 = 8, 16
    logits1 = jax.random.normal(k1, (N1, C1), dtype=jnp.float32) * 2.0
    targets1 = jax.random.randint(k2, (N1,), 0, C1, dtype=jnp.int32)
    loss1 = jax.block_until_ready(dca_loss(logits1, targets1, beta=1.0))
    ref1 = _dca_reference(logits1, targets1, beta=1.0)
    assert jnp.allclose(loss1, ref1, atol=1e-5, rtol=1e-5), (loss1, ref1)

    # Case 2: multi-tile grid with a ragged last tile (exercises masking).
    N2, C2 = 37, 24
    logits2 = jax.random.normal(k3, (N2, C2), dtype=jnp.float32) * 3.0
    targets2 = jax.random.randint(k4, (N2,), 0, C2, dtype=jnp.int32)
    loss2 = jax.block_until_ready(dca_loss(logits2, targets2, beta=0.5, block_n=16))
    ref2 = _dca_reference(logits2, targets2, beta=0.5)
    assert jnp.allclose(loss2, ref2, atol=1e-5, rtol=1e-5), (loss2, ref2)

    # Case 3: exact multiple of the tile (no masking path, multi-step grid).
    N3, C3 = 64, 32
    logits3 = jax.random.normal(k5, (N3, C3), dtype=jnp.float32)
    targets3 = jax.random.randint(k6, (N3,), 0, C3, dtype=jnp.int32)
    loss3 = jax.block_until_ready(dca_loss(logits3, targets3, beta=2.0, block_n=16))
    ref3 = _dca_reference(logits3, targets3, beta=2.0)
    assert jnp.allclose(loss3, ref3, atol=1e-5, rtol=1e-5), (loss3, ref3)

    print("KERNEL_OK")
</pallas_src>

<mosaic_0001>
module attributes {stable_mosaic.version = 11 : i64} {
  func.func @_dca_kernel(%arg0: i32, %arg1: memref<1xf32, #tpu.memory_space<smem>>, %arg2: memref<8x16xf32, #tpu.memory_space<vmem>>, %arg3: memref<8x1xi32, #tpu.memory_space<vmem>>, %arg4: memref<1x1xf32, #tpu.memory_space<smem>>, %arg5: memref<2xf32, #tpu.memory_space<smem>>) attributes {dimension_semantics = [#tpu.dimension_semantics<arbitrary>], iteration_bounds = array<i64: 1>, scalar_prefetch = 0 : i64, scratch_operands = 1 : i64, tpu.core_type = #tpu.core_type<tc>, window_params = [{transform_indices = @transform_0, window_bounds = array<i64: 1>}, {transform_indices = @transform_1, window_bounds = array<i64: 8, 16>}, {transform_indices = @transform_2, window_bounds = array<i64: 8, 1>}, {transform_indices = @transform_3, window_bounds = array<i64: 1, 1>}]} {
    %c0_i32 = arith.constant 0 : i32
    %0 = arith.cmpi eq, %arg0, %c0_i32 : i32
    %1 = arith.extui %0 : i1 to i32
    %c0_i32_0 = arith.constant 0 : i32
    %2 = arith.cmpi ne, %1, %c0_i32_0 : i32
    scf.if %2 {
      %cst_14 = arith.constant 0.000000e+00 : f32
      %c0_15 = arith.constant 0 : index
      %51 = memref.load %arg5[%c0_15] : memref<2xf32, #tpu.memory_space<smem>>
      memref.store %cst_14, %arg5[%c0_15] : memref<2xf32, #tpu.memory_space<smem>>
      %cst_16 = arith.constant 0.000000e+00 : f32
      %c1_17 = arith.constant 1 : index
      %52 = memref.load %arg5[%c1_17] : memref<2xf32, #tpu.memory_space<smem>>
      memref.store %cst_16, %arg5[%c1_17] : memref<2xf32, #tpu.memory_space<smem>>
    } else {
    }
    %c0 = arith.constant 0 : index
    %c0_1 = arith.constant 0 : index
    %3 = vector.load %arg2[%c0, %c0_1] : memref<8x16xf32, #tpu.memory_space<vmem>>, vector<8x16xf32>
    %c0_2 = arith.constant 0 : index
    %c0_3 = arith.constant 0 : index
    %4 = vector.load %arg3[%c0_2, %c0_3] : memref<8x1xi32, #tpu.memory_space<vmem>>, vector<8x1xi32>
    %cst = arith.constant dense<0xFF800000> : vector<8xf32>
    %5 = vector.multi_reduction <maximumf>, %3, %cst [1] : vector<8x16xf32> to vector<8xf32>
    %6 = vector.shape_cast %5 : vector<8xf32> to vector<8x1xf32>
    %7 = vector.broadcast %6 : vector<8x1xf32> to vector<8x16xf32>
    %8 = arith.subf %3, %7 : vector<8x16xf32>
    %9 = math.exp %8 : vector<8x16xf32>
    %cst_4 = arith.constant dense<0.000000e+00> : vector<8xf32>
    %10 = vector.multi_reduction <add>, %9, %cst_4 [1] : vector<8x16xf32> to vector<8xf32>
    %11 = vector.shape_cast %10 : vector<8xf32> to vector<8x1xf32>
    %12 = tpu.reciprocal %11 : vector<8x1xf32> -> vector<8x1xf32>
    %13 = tpu.iota {dimensions = array<i32: 1>} : vector<8x16xi32>
    %14 = vector.broadcast %4 : vector<8x1xi32> to vector<8x16xi32>
    %15 = arith.cmpi eq, %13, %14 : vector<8x16xi32>
    %16 = arith.extui %15 : vector<8x16xi1> to vector<8x16xi32>
    %17 = arith.sitofp %16 : vector<8x16xi32> to vector<8x16xf32>
    %18 = arith.mulf %3, %17 : vector<8x16xf32>
    %cst_5 = arith.constant dense<0.000000e+00> : vector<8xf32>
    %19 = vector.multi_reduction <add>, %18, %cst_5 [1] : vector<8x16xf32> to vector<8xf32>
    %20 = vector.shape_cast %19 : vector<8xf32> to vector<8x1xf32>
    %21 = vector.broadcast %6 : vector<8x1xf32> to vector<8x16xf32>
    %22 = arith.cmpf oeq, %3, %21 : vector<8x16xf32>
    %c16_i32 = arith.constant 16 : i32
    %23 = vector.broadcast %c16_i32 : i32 to vector<8x16xi32>
    %24 = arith.select %22, %13, %23 : vector<8x16xi1>, vector<8x16xi32>
    %cst_6 = arith.constant dense<2147483647> : vector<8xi32>
    %25 = vector.multi_reduction <minsi>, %24, %cst_6 [1] : vector<8x16xi32> to vector<8xi32>
    %26 = vector.shape_cast %25 : vector<8xi32> to vector<8x1xi32>
    %27 = arith.cmpi eq, %26, %4 : vector<8x1xi32>
    %28 = arith.extui %27 : vector<8x1xi1> to vector<8x1xi32>
    %29 = arith.sitofp %28 : vector<8x1xi32> to vector<8x1xf32>
    %30 = math.log %11 : vector<8x1xf32>
    %31 = arith.addf %6, %30 : vector<8x1xf32>
    %32 = arith.subf %31, %20 : vector<8x1xf32>
    %33 = vector.shape_cast %32 : vector<8x1xf32> to vector<1x8x1xf32>
    %cst_7 = arith.constant dense<0.000000e+00> : vector<1xf32>
    %34 = vector.multi_reduction <add>, %33, %cst_7 [1, 2] : vector<1x8x1xf32> to vector<1xf32>
    %35 = vector.shape_cast %34 : vector<1xf32> to vector<1x1x1xf32>
    %36 = vector.extract %35[0, 0, 0] : f32 from vector<1x1x1xf32>
    %37 = arith.subf %12, %29 : vector<8x1xf32>
    %38 = vector.shape_cast %37 : vector<8x1xf32> to vector<1x8x1xf32>
    %cst_8 = arith.constant dense<0.000000e+00> : vector<1xf32>
    %39 = vector.multi_reduction <add>, %38, %cst_8 [1, 2] : vector<1x8x1xf32> to vector<1xf32>
    %40 = vector.shape_cast %39 : vector<1xf32> to vector<1x1x1xf32>
    %41 = vector.extract %40[0, 0, 0] : f32 from vector<1x1x1xf32>
    %c0_9 = arith.constant 0 : index
    %42 = memref.load %arg5[%c0_9] : memref<2xf32, #tpu.memory_space<smem>>
    %43 = arith.addf %42, %36 : f32
    %c0_10 = arith.constant 0 : index
    %44 = memref.load %arg5[%c0_10] : memref<2xf32, #tpu.memory_space<smem>>
    memref.store %43, %arg5[%c0_10] : memref<2xf32, #tpu.memory_space<smem>>
    %c1 = arith.constant 1 : index
    %45 = memref.load %arg5[%c1] : memref<2xf32, #tpu.memory_space<smem>>
    %46 = arith.addf %45, %41 : f32
    %c1_11 = arith.constant 1 : index
    %47 = memref.load %arg5[%c1_11] : memref<2xf32, #tpu.memory_space<smem>>
    memref.store %46, %arg5[%c1_11] : memref<2xf32, #tpu.memory_space<smem>>
    %c0_i32_12 = arith.constant 0 : i32
    %48 = arith.cmpi eq, %arg0, %c0_i32_12 : i32
    %49 = arith.extui %48 : i1 to i32
    %c0_i32_13 = arith.constant 0 : i32
    %50 = arith.cmpi ne, %49, %c0_i32_13 : i32
    scf.if %50 {
      %c0_14 = arith.constant 0 : index
      %51 = memref.load %arg5[%c0_14] : memref<2xf32, #tpu.memory_space<smem>>
      %cst_15 = arith.constant 1.250000e-01 : f32
      %52 = arith.mulf %51, %cst_15 : f32
      %c0_16 = arith.constant 0 : index
      %53 = memref.load %arg1[%c0_16] : memref<1xf32, #tpu.memory_space<smem>>
      %c1_17 = arith.constant 1 : index
      %54 = memref.load %arg5[%c1_17] : memref<2xf32, #tpu.memory_space<smem>>
      %cst_18 = arith.constant 1.250000e-01 : f32
      %55 = arith.mulf %54, %cst_18 : f32
      %56 = math.absf %55 : f32
      %57 = arith.mulf %53, %56 : f32
      %58 = arith.addf %52, %57 : f32
      %c0_19 = arith.constant 0 : index
      %c0_20 = arith.constant 0 : index
      %59 = memref.load %arg4[%c0_19, %c0_20] : memref<1x1xf32, #tpu.memory_space<smem>>
      memref.store %58, %arg4[%c0_19, %c0_20] : memref<1x1xf32, #tpu.memory_space<smem>>
    } else {
    }
    return
  }
  func.func @transform_0(%arg0: i32) -> i32 {
    %c0_i32 = arith.constant 0 : i32
    %c0_i32_0 = arith.constant 0 : i32
    return %c0_i32 : i32
  }
  func.func @transform_1(%arg0: i32) -> (i32, i32) {
    %c0_i32 = arith.constant 0 : i32
    %c0_i32_0 = arith.constant 0 : i32
    return %arg0, %c0_i32 : i32, i32
  }
  func.func @transform_2(%arg0: i32) -> (i32, i32) {
    %c0_i32 = arith.constant 0 : i32
    %c0_i32_0 = arith.constant 0 : i32
    return %arg0, %c0_i32 : i32, i32
  }
  func.func @transform_3(%arg0: i32) -> (i32, i32) {
    %c0_i32 = arith.constant 0 : i32
    %c0_i32_0 = arith.constant 0 : i32
    %c0_i32_1 = arith.constant 0 : i32
    return %c0_i32, %c0_i32_0 : i32, i32
  }
}

</mosaic_0001>

<llo_original>
// kernel: tpu_custom_call.1
$region0: #{tpu_custom_call.1}
  #allocation0 [shape = 'u32[]', space=smem, size = 0x4, offset = 0x4, fixed_abs, tag = 'smem constant byte address 0x4 - core index']
  #allocation1 [shape = 'u32[144,128]{1,0:T(1,128)}', space=vmem, size = 0x12000, scoped, tag = 'internal scratch']
  #allocation2 [shape = 'f32[2]{0:T(128)}', space=smem, size = 0x200, scoped, tag = 'scratch operand']
  #allocation3 [shape = 'f32[1]{0:T(128)S(6)}', space=smem, size = 0x200, scoped, tag = 'scoped memory for tpu_custom_call.1']
  %s0 = inlined_call_operand.<no memory space> [shape: f32[1], index: 0, kind: input, shape index: {}]
  %s1 = inlined_call_operand.vmem [shape: f32[8,16], index: 1, kind: input, shape index: {}]
  %s2 = inlined_call_operand.vmem [shape: s32[8,1], index: 2, kind: input, shape index: {}]
  %s3 = inlined_call_operand.hbm [shape: f32[1,1], index: 3, kind: output, shape index: {}]
  %s4 = sld [smem:[#allocation0]]
  $region30: #{tpu_custom_call.1} parent=0
    _
  %s6 = ssub.s32 1, %s4
  %s7 = scalar_select 0, %s6, %s4
  %8 = sst [smem:[#allocation3]] %s0
  $region1: #{tpu_custom_call.1} parent=0
    #allocation4 [shape = 'u8[512]{0}', space=smem, size = 0x200, scoped, tag = 'output window, operand 0, single buffered']
    #allocation5 [shape = 's32[1]{0}', space=sflag, size = 0x4, scoped, tag = 'scoped memory for tpu_custom_call.1']
    %9 = vsyncpa [#allocation5], 0
    // Predicated region
    $region2: #{tpu_custom_call.1} parent=1 // pred_check
      _
    $region3: #{tpu_custom_call.1} parent=1 // pred_check_branch
      %11 = sbr.rel (0) target = $region5
    $region4: #{tpu_custom_call.1} parent=1 // pred_region
      _
    $region5: #{tpu_custom_call.1} parent=1 // pred_fallthru
      _
    // Predicated region
    $region6: #{tpu_custom_call.1} parent=1 // pred_check
      _
    $region7: #{tpu_custom_call.1} parent=1 // pred_check_branch
      %13 = sbr.rel (0) target = $region9
    $region8: #{tpu_custom_call.1} parent=1 // pred_region
      _
    $region9: #{tpu_custom_call.1} parent=1 // pred_fallthru
      _
    // Predicated region
    $region10: #{tpu_custom_call.1} parent=1 // pred_check
      _
    $region11: #{tpu_custom_call.1} parent=1 // pred_check_branch
      %15 = sbr.rel (0) target = $region13
    $region12: #{tpu_custom_call.1} parent=1 // pred_region
      _
    $region13: #{tpu_custom_call.1} parent=1 // pred_fallthru
      _
    %p16 = scmp.eq.s32.totalorder 0, 0
    // Predicated region
    $region14: #{tpu_custom_call.1} parent=1 // pred_check
      %p17 = pneg %p16
    $region15: #{tpu_custom_call.1} parent=1 // pred_check_branch
      %19 = sbr.rel (%p17) target = $region17
    $region16: #{tpu_custom_call.1} parent=1 // pred_region
      %s20 = scalar_lea.smem [#allocation2], 0
      %21 = sst [smem:[%s20]] 0.0
      %s22 = scalar_lea.smem [#allocation2], 1
      %23 = sst [smem:[%s22]] 0.0
    $region17: #{tpu_custom_call.1} parent=1 // pred_fallthru
      _
    %v24 = vld [vmem:[%s1] sm:$0xff]
    %v25 = vld [vmem:[%s2] sm:$0xff]
    %vm26 = vcmask 130048
    %v27 = vsel %vm26, %v24, -inf
    %28 = vmax.xlane.f32.xlu0 %v27
    %v29 = vpop.xlane.xlu0 %28
    %v30 = vsub.f32 %v24, %v29
    %v31 = vmul.f32 %v30, 1.442695
    %v32 = vpow.pop %v31
    %v33 = vsel %vm26, %v32, 0.0
    %34 = vadd.xlane.f32.xlu0 %v33
    %v35 = vpop.xlane.xlu0 %34
    %v36 = vrcp.pop %v35
    %v37 = vlaneseq
    %v38 = vand.u32 %v37, 127
    %39 = vset.pattern.permute.xlu0 0
    %40 = vperm.xlu0 %39, %v25
    %v41 = vpop.permute.xlu0 %40
    %vm42 = vcmp.eq.s32.totalorder %v38, %v41
    %v43 = vsel %vm42, 1, 0
    %v44 = vcvt.s32.f32 %v43
    %v45 = vmul.f32 %v24, %v44
    %v46 = vsel %vm26, %v45, 0.0
    %47 = vadd.xlane.f32.xlu0 %v46
    %v48 = vpop.xlane.xlu0 %47
    %vm49 = vcmp.eq.f32.partialorder %v24, %v29
    %v50 = vsel %vm49, %v38, 16
    %v51 = vsel %vm26, %v50, 2147483647
    %v52 = vand.u32 %v51, 65535
    %v53 = vshra.s32 %v51, 16
    %v54 = vcvt.s32.f32 %v52
    %v55 = vcvt.s32.f32 %v53
    %56 = vmin.xlane.f32.xlu0 %v55
    %v57 = vpop.xlane.xlu0 %56
    %vm58 = vcmp.eq.f32.partialorder %v55, %v57
    %v59 = vsel %vm58, %v54, inf
    %60 = vmin.xlane.f32.xlu0 %v59
    %v61 = vpop.xlane.xlu0 %60
    %v62 = vcvt.f32.s32 %v61
    %v63 = vcvt.f32.s32 %v57
    %v64 = vshll.u32 %v63, 16
    %v65 = vadd.s32 %v64, %v62
    %vm66 = vcmp.eq.s32.totalorder %v65, %v25
    %v67 = vsel %vm66, 1, 0
    %v68 = vcvt.s32.f32 %v67
    %v69 = vlog2.pop %v35
    %v70 = vmul.f32 %v69, 0.6931472
    %v71 = vadd.f32 %v29, %v70
    %v72 = vsub.f32 %v71, %v48
    %vm73 = vcmask 7168
    %v74 = vsel %vm73, %v72, 0.0
    %75 = vadd.xlane.f32.xlu0 %v74
    %v76 = vpop.xlane.xlu0 %75
    %v77 = vrot.slane %v76, 4
    %v78 = vadd.f32 %v76, %v77
    %v79 = vrot.slane %v78, 2
    %v80 = vadd.f32 %v78, %v79
    %v81 = vrot.slane %v80, 1
    %v82 = vadd.f32 %v80, %v81
    %s83 = vtos %v82
    %v84 = vsub.f32 %v36, %v68
    %v85 = vsel %vm73, %v84, 0.0
    %86 = vadd.xlane.f32.xlu0 %v85
    %v87 = vpop.xlane.xlu0 %86
    %v88 = vrot.slane %v87, 4
    %v89 = vadd.f32 %v87, %v88
    %v90 = vrot.slane %v89, 2
    %v91 = vadd.f32 %v89, %v90
    %v92 = vrot.slane %v91, 1
    %v93 = vadd.f32 %v91, %v92
    %s94 = vtos %v93
    %s95 = sld [smem:[#allocation2]]
    %s96 = sadd.f32 %s95, %s83
    %s97 = scalar_lea.smem [#allocation2], 0
    %98 = sst [smem:[%s97]] %s96
    %s99 = sld [smem:[#allocation2 + $0x1]]
    %s100 = sadd.f32 %s99, %s94
    %s101 = scalar_lea.smem [#allocation2], 1
    %102 = sst [smem:[%s101]] %s100
    // Predicated region
    $region18: #{tpu_custom_call.1} parent=1 // pred_check
      %p103 = pneg %p16
    $region19: #{tpu_custom_call.1} parent=1 // pred_check_branch
      %105 = sbr.rel (%p103) target = $region21
    $region20: #{tpu_custom_call.1} parent=1 // pred_region
      %s106 = sld [smem:[#allocation2]]
      %s107 = smul.f32 %s106, 0.125
      %s108 = sld [smem:[#allocation3]]
      %s109 = sld [smem:[#allocation2 + $0x1]]
      %s110 = smul.f32 %s109, 0.125
      %s111 = sand.u32 2147483647, %s110
      %s112 = smul.f32 %s108, %s111
      %s113 = sadd.f32 %s107, %s112
      %s114 = scalar_lea.smem [#allocation4], 0
      %115 = sst [smem:[%s114]] %s113
    $region21: #{tpu_custom_call.1} parent=1 // pred_fallthru
      _
    // Predicated region
    $region22: #{tpu_custom_call.1} parent=1 // pred_check
      _
    $region23: #{tpu_custom_call.1} parent=1 // pred_check_branch
      %117 = sbr.rel (0) target = $region25
    $region24: #{tpu_custom_call.1} parent=1 // pred_region
      %s119 = ssub.s32 16, 16
      %120 = vsyncadd [#allocation5], %s119
      %123 = dma.smem_to_hbm [#allocation4], 16, %s3, [#allocation5]
    $region25: #{tpu_custom_call.1} parent=1 // pred_fallthru
      _
    // Predicated region
    $region26: #{tpu_custom_call.1} parent=1 // pred_check
      _
    $region27: #{tpu_custom_call.1} parent=1 // pred_check_branch
      %125 = sbr.rel (0) target = $region29
    $region28: #{tpu_custom_call.1} parent=1 // pred_region
      %126 = dma.done [#allocation5], 16
    $region29: #{tpu_custom_call.1} parent=1 // pred_fallthru
      _
    %127 = sfence
    %128 = vsyncpa [#allocation5], 1

</llo_original>
